<compile_context>
chip_gen: v5e
topology: v5e:2x2
jax: 0.10.0
libtpu: 0.0.40
codegen_flags: <defaults>
</compile_context>

<pallas_src>
import functools

import jax
import jax.numpy as jnp
from jax.experimental import pallas as pl
from jax.experimental.pallas import tpu as pltpu


def _strip_copy_kernel(rows_per_step, tail_rows, n_sub, x_hbm, o_hbm, sems):
    """Copy this grid step's rows of x[0] directly HBM -> HBM.

    Issues up to `n_sub` outstanding DMAs (start all, then wait all) using
    the per-sub-chunk DMA semaphore array `sems`.
    """
    i = pl.program_id(0)
    start = i * rows_per_step

    def issue_and_wait(nrows):
        # Split `nrows` (static) into n_sub near-equal static-size chunks.
        base = nrows // n_sub
        rem = nrows % n_sub
        sizes = [base + (1 if k < rem else 0) for k in range(n_sub)]
        copies = []
        off = 0
        for k, sz in enumerate(sizes):
            if sz == 0:
                continue
            cp = pltpu.make_async_copy(
                x_hbm.at[0, pl.ds(start + off, sz)],   # (sz, H) rows of x[0]
                o_hbm.at[pl.ds(start + off, sz)],      # matching output rows
                sems.at[k],
            )
            cp.start()
            copies.append(cp)
            off += sz
        # Wait only after every sub-chunk DMA has been issued.
        for cp in copies:
            cp.wait()

    if rows_per_step == tail_rows:
        # Uniform split (includes the n_steps == 1 case): single code path.
        issue_and_wait(rows_per_step)
    else:
        # Ceil split with a shorter final chunk: guard the tail with pl.when
        # so no DMA ever reads/writes past the end of the slab.
        is_tail = i == (pl.num_programs(0) - 1)

        @pl.when(jnp.logical_not(is_tail))
        def _():
            issue_and_wait(rows_per_step)

        @pl.when(is_tail)
        def _():
            issue_and_wait(tail_rows)


def strip_cell_and_hidden(x, flag_return_tuple: bool):
    """x: jnp array of shape (N, B, S, H). Returns x[0] (or tuple(x[0]))."""
    N, B, S, H = x.shape
    rows = B * S
    itemsize = jnp.dtype(x.dtype).itemsize
    copy_bytes = rows * H * itemsize

    # Metadata-only reshape of the contiguous input; output is built flat
    # and reshaped back (also metadata-only).
    x_flat = x.reshape(N, rows, H)

    # Outer split across TensorCores (v7x megacore) only when each half is a
    # substantial copy (>= ~1 MiB); otherwise a single grid step.
    MIN_CORE_CHUNK_BYTES = 1 << 20      # 1 MiB per core-chunk
    MIN_SUB_CHUNK_BYTES = 512 << 10     # 512 KiB per outstanding DMA

    n_steps = 2 if (copy_bytes >= 2 * MIN_CORE_CHUNK_BYTES and rows >= 2) else 1
    rows_per_step = pl.cdiv(rows, n_steps)
    tail_rows = rows - (n_steps - 1) * rows_per_step

    # Number of outstanding DMAs per grid step (start all, then wait all).
    step_bytes = rows_per_step * H * itemsize
    n_sub = int(max(1, min(8, step_bytes // MIN_SUB_CHUNK_BYTES, rows_per_step)))

    kernel = functools.partial(_strip_copy_kernel, rows_per_step, tail_rows, n_sub)

    y_flat = pl.pallas_call(
        kernel,
        out_shape=jax.ShapeDtypeStruct((rows, H), x.dtype),
        grid_spec=pltpu.PrefetchScalarGridSpec(
            num_scalar_prefetch=0,
            grid=(n_steps,),
            in_specs=[pl.BlockSpec(memory_space=pl.ANY)],   # raw HBM ref
            out_specs=pl.BlockSpec(memory_space=pl.ANY),    # raw HBM ref
            scratch_shapes=[pltpu.SemaphoreType.DMA((n_sub,))],
        ),
        compiler_params=pltpu.CompilerParams(
            dimension_semantics=("parallel",),
        ),
        cost_estimate=pl.CostEstimate(
            flops=0,
            transcendentals=0,
            bytes_accessed=2 * copy_bytes,   # read x[0] + write output
        ),
    )(x_flat)

    y = y_flat.reshape(B, S, H)

    if flag_return_tuple:
        # Python `tuple(tensor)` iterates along dim 0 -> tuple of (S, H) slices.
        return tuple(y[b] for b in range(B))
    return y


if __name__ == "__main__":
    key = jax.random.PRNGKey(0)
    # N=3 "tuple" entries (e.g. output, h_n-like, c_n-like), B=2, S=16, H=32
    N, B, S, H = 3, 2, 16, 32
    x = jax.random.normal(key, (N, B, S, H), dtype=jnp.float32)
    ref = x[0]

    # flagReturnTuple = False path
    y = strip_cell_and_hidden(x, flag_return_tuple=False)
    y = jax.block_until_ready(y)
    assert y.shape == (B, S, H)
    assert jnp.array_equal(y, ref), "mismatch vs reference x[0]"

    # flagReturnTuple = True path (glue-level tuple unpacking)
    yt = strip_cell_and_hidden(x, flag_return_tuple=True)
    yt = tuple(jax.block_until_ready(t) for t in yt)
    assert isinstance(yt, tuple) and len(yt) == B
    for b in range(B):
        assert jnp.array_equal(yt[b], ref[b]), "tuple element mismatch"

    print("KERNEL_OK")
</pallas_src>

<mosaic_0001>
module attributes {stable_mosaic.version = 11 : i64} {
  func.func @_strip_copy_kernel(%arg0: i32, %arg1: memref<3x32x32xf32, #tpu.memory_space<any>>, %arg2: memref<32x32xf32, #tpu.memory_space<any>>, %arg3: memref<1x!tpu.dma_semaphore, #tpu.memory_space<semaphore_mem>>) attributes {dimension_semantics = [#tpu.dimension_semantics<parallel>], iteration_bounds = array<i64: 1>, scalar_prefetch = 0 : i64, scratch_operands = 1 : i64, tpu.core_type = #tpu.core_type<tc>, window_params = [{}, {}]} {
    %c32_i32 = arith.constant 32 : i32
    %0 = arith.muli %arg0, %c32_i32 : i32
    %c0_i32 = arith.constant 0 : i32
    %1 = arith.addi %0, %c0_i32 : i32
    %c0_i32_0 = arith.constant 0 : i32
    %2 = arith.addi %0, %c0_i32_0 : i32
    %c0_i32_1 = arith.constant 0 : i32
    %c0_i32_2 = arith.constant 0 : i32
    %c0_i32_3 = arith.constant 0 : i32
    %3 = tpu.memref_slice %arg1[%c0_i32_1, %1, %c0_i32_3] : memref<3x32x32xf32, #tpu.memory_space<any>> -> memref<1x32x32xf32, #tpu.memory_space<any>>
    %4 = tpu.memref_squeeze %3 : memref<1x32x32xf32, #tpu.memory_space<any>> -> memref<32x32xf32, #tpu.memory_space<any>>
    %c0_i32_4 = arith.constant 0 : i32
    %5 = tpu.memref_slice %arg2[%2, %c0_i32_4] : memref<32x32xf32, #tpu.memory_space<any>> -> memref<32x32xf32, #tpu.memory_space<any>>
    %6 = tpu.memref_slice %arg3[%c0_i32_2] : memref<1x!tpu.dma_semaphore, #tpu.memory_space<semaphore_mem>> -> memref<1x!tpu.dma_semaphore, #tpu.memory_space<semaphore_mem>>
    %7 = tpu.memref_squeeze %6 : memref<1x!tpu.dma_semaphore, #tpu.memory_space<semaphore_mem>> -> memref<!tpu.dma_semaphore, #tpu.memory_space<semaphore_mem>>
    tpu.enqueue_dma source(%4 : memref<32x32xf32, #tpu.memory_space<any>>) target(%5 : memref<32x32xf32, #tpu.memory_space<any>>) target_semaphore(%7 : memref<!tpu.dma_semaphore, #tpu.memory_space<semaphore_mem>>)
    %c0_i32_5 = arith.constant 0 : i32
    %c0_i32_6 = arith.constant 0 : i32
    %c0_i32_7 = arith.constant 0 : i32
    %8 = tpu.memref_slice %arg1[%c0_i32_5, %1, %c0_i32_7] : memref<3x32x32xf32, #tpu.memory_space<any>> -> memref<1x32x32xf32, #tpu.memory_space<any>>
    %9 = tpu.memref_squeeze %8 : memref<1x32x32xf32, #tpu.memory_space<any>> -> memref<32x32xf32, #tpu.memory_space<any>>
    %c0_i32_8 = arith.constant 0 : i32
    %10 = tpu.memref_slice %arg2[%2, %c0_i32_8] : memref<32x32xf32, #tpu.memory_space<any>> -> memref<32x32xf32, #tpu.memory_space<any>>
    %11 = tpu.memref_slice %arg3[%c0_i32_6] : memref<1x!tpu.dma_semaphore, #tpu.memory_space<semaphore_mem>> -> memref<1x!tpu.dma_semaphore, #tpu.memory_space<semaphore_mem>>
    %12 = tpu.memref_squeeze %11 : memref<1x!tpu.dma_semaphore, #tpu.memory_space<semaphore_mem>> -> memref<!tpu.dma_semaphore, #tpu.memory_space<semaphore_mem>>
    tpu.wait_dma2 semaphore(%12 : memref<!tpu.dma_semaphore, #tpu.memory_space<semaphore_mem>>) src(%9 : memref<32x32xf32, #tpu.memory_space<any>>) dst(%10 : memref<32x32xf32, #tpu.memory_space<any>>)
    return
  }
}

</mosaic_0001>

<llo_original>
// kernel: tpu_custom_call.1
$region0: #{tpu_custom_call.1}
  #allocation0 [shape = 'u32[]', space=smem, size = 0x4, offset = 0x4, fixed_abs, tag = 'smem constant byte address 0x4 - core index']
  #allocation1 [shape = 'u32[72,128]{1,0:T(1,128)}', space=vmem, size = 0x9000, scoped, tag = 'internal scratch']
  #allocation2 [shape = 's32[1]{0}', space=sflag, size = 0x4, scoped, tag = 'scratch operand']
  #allocation3 [shape = 's32[]', space=sflag, size = 0x4, offset = 0, fixed_abs, tag = 'sflag constant byte address 0x0 - dummy sync flag']
  #allocation4 [shape = 'u32[0]{0}', space=smem, size = 0, offset = 0, fixed_abs, tag = 'smem constant byte address 0x0 - null']
  %s0 = inlined_call_operand.hbm [shape: f32[3,32,32], index: 0, kind: input, shape index: {}]
  %s1 = inlined_call_operand.hbm [shape: f32[32,32], index: 1, kind: output, shape index: {}]
  %s2 = sld [smem:[#allocation0]]
  $region2: #{tpu_custom_call.1} parent=0
    _
  %s4 = ssub.s32 1, %s2
  %s5 = scalar_select 0, %s4, %s2
  %s6 = smul.u32 0, 32
  %s7 = scalar_lea.hbm %s0, %s6
  %s8 = scalar_lea.hbm %s1, %s6
  %s10 = sshll.u32 1, 14
  %s11 = sxor.u32 4294967295, %s10
  %s13 = sshll.u32 %s7, 4
  %s14 = int_to_ptr.hbm [resolvable:$true] %s13
  %s15 = sshll.u32 %s8, 4
  %s16 = int_to_ptr.hbm [resolvable:$true] %s15
  %19 = dma.general %s14, 512, %s16, [#allocation2], [#allocation3], [#allocation4], 0, 0
  %s20 = smul.u32 32, 1
  %s21 = sshll.u32 %s20, 4
  %22 = dma.done [#allocation2], %s21
  %23 = vsyncmov [#allocation2]
  %s24 = vpop.sfrf %23
  %p25 = scmp.eq.s32.totalorder %s24, 0
  %p26 = pneg %p25
  %28 = shalt.err (%p26)

</llo_original>
